<compile_context>
chip_gen: v5e
topology: v5e:2x2
jax: 0.10.0
libtpu: 0.0.40
codegen_flags: <defaults>
</compile_context>

<pallas_src>
import functools

import jax
import jax.numpy as jnp
from jax.experimental import pallas as pl
from jax.experimental.pallas import tpu as pltpu

LANE = 128          # TPU lane width (last-dim tiling unit)
SUBLANE = 8         # f32 sublane tiling unit
NEG_BIG = -1e30     # "minus infinity" for padded class logits (finite, no NaN)


def _round_up(n, m):
    return ((n + m - 1) // m) * m


def mlp_softmax_kernel(x_ref, w1_ref, b1_ref, w2_ref, b2_ref, w3_ref, b3_ref,
                       o_ref):
    # Layer 1: Linear + ReLU  (all operands lane-dense 128-wide)
    h = jnp.dot(x_ref[...], w1_ref[...],
                preferred_element_type=jnp.float32) + b1_ref[...]
    h = jnp.maximum(h, 0.0)
    # Layer 2: Linear + ReLU
    h = jnp.dot(h, w2_ref[...],
                preferred_element_type=jnp.float32) + b2_ref[...]
    h = jnp.maximum(h, 0.0)
    # Final Linear.  Padded class columns carry a -1e30 bias so their
    # exp() underflows to exactly 0 and the softmax normalizes over the
    # real classes only.
    logits = jnp.dot(h, w3_ref[...],
                     preferred_element_type=jnp.float32) + b3_ref[...]
    # Numerically stable softmax over the class (lane) axis.
    m = jnp.max(logits, axis=1, keepdims=True)
    e = jnp.exp(logits - m)
    denom = jnp.sum(e, axis=1, keepdims=True)
    # Divide -> EUP approximate reciprocal + VPU multiply.
    o_ref[...] = e * pl.reciprocal(denom, approx=True)


@functools.partial(jax.jit, static_argnames=("tm",))
def feedforward_flexible(x, params, *, tm=256):
    """x: [B, h0] float32.  params: (w1,b1,w2,b2,w3,b3) with
    w_k: [in, out] (transpose of torch nn.Linear weight), b_k: [out]."""
    w1, b1, w2, b2, w3, b3 = params
    B, h0 = x.shape
    h1 = w1.shape[1]
    h2 = w2.shape[1]
    C = w3.shape[1]

    # ---- pad every feature dimension to the 128-lane width -----------------
    h0p, h1p, h2p, Cp = (_round_up(d, LANE) for d in (h0, h1, h2, C))

    def pad_w(w, ip, op):
        return jnp.pad(w.astype(jnp.float32),
                       ((0, ip - w.shape[0]), (0, op - w.shape[1])))

    def pad_b(b, op, fill=0.0):
        b = b.reshape(1, -1).astype(jnp.float32)
        return jnp.pad(b, ((0, 0), (0, op - b.shape[1])),
                       constant_values=fill)

    w1p, w2p, w3p = pad_w(w1, h0p, h1p), pad_w(w2, h1p, h2p), pad_w(w3, h2p, Cp)
    b1p, b2p = pad_b(b1, h1p), pad_b(b2, h2p)
    b3p = pad_b(b3, Cp, fill=NEG_BIG)          # kill padded classes in softmax

    # ---- tile the batch axis ------------------------------------------------
    TM = min(tm, max(SUBLANE, _round_up(B, SUBLANE)))
    Bp = _round_up(B, TM)
    xp = jnp.pad(x.astype(jnp.float32), ((0, Bp - B), (0, h0p - h0)))
    grid = (Bp // TM,)

    resident = lambda a: pl.BlockSpec(a.shape, lambda i: (0,) * a.ndim)

    cost = pl.CostEstimate(
        flops=2 * Bp * (h0p * h1p + h1p * h2p + h2p * Cp),
        transcendentals=Bp * (Cp + 1),                       # exp + reciprocal
        bytes_accessed=4 * (Bp * h0p + Bp * Cp
                            + h0p * h1p + h1p * h2p + h2p * Cp
                            + h1p + h2p + Cp),
    )

    out = pl.pallas_call(
        mlp_softmax_kernel,
        out_shape=jax.ShapeDtypeStruct((Bp, Cp), jnp.float32),
        grid=grid,
        in_specs=[
            pl.BlockSpec((TM, h0p), lambda i: (i, 0)),   # x: tiled over batch
            resident(w1p), resident(b1p),                # weights/biases stay
            resident(w2p), resident(b2p),                # resident in VMEM
            resident(w3p), resident(b3p),
        ],
        out_specs=pl.BlockSpec((TM, Cp), lambda i: (i, 0)),
        compiler_params=pltpu.CompilerParams(
            dimension_semantics=("parallel",)),
        cost_estimate=cost,
    )(xp, w1p, b1p, w2p, b2p, w3p, b3p)

    return out[:B, :C]


def init_linear(key, fan_in, fan_out):
    """PyTorch-style nn.Linear init: U(-1/sqrt(fan_in), +1/sqrt(fan_in))."""
    kw, kb = jax.random.split(key)
    bound = 1.0 / jnp.sqrt(float(fan_in))
    # Stored as [in, out] (transpose of torch's [out, in]); math identical.
    w = jax.random.uniform(kw, (fan_in, fan_out), jnp.float32, -bound, bound)
    b = jax.random.uniform(kb, (fan_out,), jnp.float32, -bound, bound)
    return w, b


def reference(x, params):
    w1, b1, w2, b2, w3, b3 = params
    h = jnp.maximum(x @ w1 + b1[None, :], 0.0)
    h = jnp.maximum(h @ w2 + b2[None, :], 0.0)
    logits = h @ w3 + b3[None, :]
    return jax.nn.softmax(logits, axis=1)


if __name__ == "__main__":
    # Module config: h_sizes=[32, 64, 32], activations=[ReLU, ReLU], cardinality=4
    h_sizes = [32, 64, 32]
    cardinality = 4
    batch = 300            # non-multiple of the tile -> exercises batch padding

    key = jax.random.PRNGKey(0)
    kx, k1, k2, k3 = jax.random.split(key, 4)

    x = jax.random.normal(kx, (batch, h_sizes[0]), jnp.float32)
    w1, b1 = init_linear(k1, h_sizes[0], h_sizes[1])
    w2, b2 = init_linear(k2, h_sizes[1], h_sizes[2])
    w3, b3 = init_linear(k3, h_sizes[2], cardinality)
    params = (w1, b1, w2, b2, w3, b3)

    out = feedforward_flexible(x, params, tm=128)   # 3 grid steps of 128 rows
    out = jax.block_until_ready(out)

    ref = reference(x, params)
    assert out.shape == (batch, cardinality), out.shape
    # approx reciprocal + MXU default precision -> compare at ~1e-3.
    assert jnp.allclose(out, ref, atol=3e-3, rtol=3e-3), \
        float(jnp.max(jnp.abs(out - ref)))
    assert jnp.allclose(jnp.sum(out, axis=1), 1.0, atol=3e-3)
    assert bool(jnp.all(out >= 0.0))

    print("KERNEL_OK")
</pallas_src>

<mosaic_0001>
module attributes {stable_mosaic.version = 11 : i64} {
  func.func @mlp_softmax_kernel(%arg0: i32, %arg1: memref<128x128xf32, #tpu.memory_space<vmem>>, %arg2: memref<128x128xf32, #tpu.memory_space<vmem>>, %arg3: memref<1x128xf32, #tpu.memory_space<vmem>>, %arg4: memref<128x128xf32, #tpu.memory_space<vmem>>, %arg5: memref<1x128xf32, #tpu.memory_space<vmem>>, %arg6: memref<128x128xf32, #tpu.memory_space<vmem>>, %arg7: memref<1x128xf32, #tpu.memory_space<vmem>>, %arg8: memref<128x128xf32, #tpu.memory_space<vmem>>) attributes {dimension_semantics = [#tpu.dimension_semantics<parallel>], iteration_bounds = array<i64: 3>, scalar_prefetch = 0 : i64, scratch_operands = 0 : i64, tpu.core_type = #tpu.core_type<tc>, window_params = [{transform_indices = @transform_0, window_bounds = array<i64: 128, 128>}, {pipeline_mode = #tpu.pipeline_mode<synchronous>, transform_indices = @transform_1, window_bounds = array<i64: 128, 128>}, {pipeline_mode = #tpu.pipeline_mode<synchronous>, transform_indices = @transform_2, window_bounds = array<i64: 1, 128>}, {pipeline_mode = #tpu.pipeline_mode<synchronous>, transform_indices = @transform_3, window_bounds = array<i64: 128, 128>}, {pipeline_mode = #tpu.pipeline_mode<synchronous>, transform_indices = @transform_4, window_bounds = array<i64: 1, 128>}, {pipeline_mode = #tpu.pipeline_mode<synchronous>, transform_indices = @transform_5, window_bounds = array<i64: 128, 128>}, {pipeline_mode = #tpu.pipeline_mode<synchronous>, transform_indices = @transform_6, window_bounds = array<i64: 1, 128>}, {transform_indices = @transform_7, window_bounds = array<i64: 128, 128>}]} {
    %c0 = arith.constant 0 : index
    %c0_0 = arith.constant 0 : index
    %0 = vector.load %arg1[%c0, %c0_0] : memref<128x128xf32, #tpu.memory_space<vmem>>, vector<128x128xf32>
    %c0_1 = arith.constant 0 : index
    %c0_2 = arith.constant 0 : index
    %1 = vector.load %arg2[%c0_1, %c0_2] : memref<128x128xf32, #tpu.memory_space<vmem>>, vector<128x128xf32>
    %cst = arith.constant dense<0.000000e+00> : vector<128x128xf32>
    %2 = tpu.matmul %0, %1, %cst {dimension_numbers = #tpu.dot_dimension_numbers<[1], [0], [0], [1], [0, 0, 1, 1], [], []>} : vector<128x128xf32>, vector<128x128xf32>, vector<128x128xf32> -> vector<128x128xf32>
    %c0_3 = arith.constant 0 : index
    %c0_4 = arith.constant 0 : index
    %3 = vector.load %arg3[%c0_3, %c0_4] : memref<1x128xf32, #tpu.memory_space<vmem>>, vector<1x128xf32>
    %4 = vector.broadcast %3 : vector<1x128xf32> to vector<128x128xf32>
    %5 = arith.addf %2, %4 : vector<128x128xf32>
    %cst_5 = arith.constant 0.000000e+00 : f32
    %6 = vector.broadcast %cst_5 : f32 to vector<128x128xf32>
    %7 = arith.maximumf %5, %6 : vector<128x128xf32>
    %c0_6 = arith.constant 0 : index
    %c0_7 = arith.constant 0 : index
    %8 = vector.load %arg4[%c0_6, %c0_7] : memref<128x128xf32, #tpu.memory_space<vmem>>, vector<128x128xf32>
    %cst_8 = arith.constant dense<0.000000e+00> : vector<128x128xf32>
    %9 = tpu.matmul %7, %8, %cst_8 {dimension_numbers = #tpu.dot_dimension_numbers<[1], [0], [0], [1], [0, 0, 1, 1], [], []>} : vector<128x128xf32>, vector<128x128xf32>, vector<128x128xf32> -> vector<128x128xf32>
    %c0_9 = arith.constant 0 : index
    %c0_10 = arith.constant 0 : index
    %10 = vector.load %arg5[%c0_9, %c0_10] : memref<1x128xf32, #tpu.memory_space<vmem>>, vector<1x128xf32>
    %11 = vector.broadcast %10 : vector<1x128xf32> to vector<128x128xf32>
    %12 = arith.addf %9, %11 : vector<128x128xf32>
    %cst_11 = arith.constant 0.000000e+00 : f32
    %13 = vector.broadcast %cst_11 : f32 to vector<128x128xf32>
    %14 = arith.maximumf %12, %13 : vector<128x128xf32>
    %c0_12 = arith.constant 0 : index
    %c0_13 = arith.constant 0 : index
    %15 = vector.load %arg6[%c0_12, %c0_13] : memref<128x128xf32, #tpu.memory_space<vmem>>, vector<128x128xf32>
    %cst_14 = arith.constant dense<0.000000e+00> : vector<128x128xf32>
    %16 = tpu.matmul %14, %15, %cst_14 {dimension_numbers = #tpu.dot_dimension_numbers<[1], [0], [0], [1], [0, 0, 1, 1], [], []>} : vector<128x128xf32>, vector<128x128xf32>, vector<128x128xf32> -> vector<128x128xf32>
    %c0_15 = arith.constant 0 : index
    %c0_16 = arith.constant 0 : index
    %17 = vector.load %arg7[%c0_15, %c0_16] : memref<1x128xf32, #tpu.memory_space<vmem>>, vector<1x128xf32>
    %18 = vector.broadcast %17 : vector<1x128xf32> to vector<128x128xf32>
    %19 = arith.addf %16, %18 : vector<128x128xf32>
    %cst_17 = arith.constant dense<0xFF800000> : vector<128xf32>
    %20 = vector.multi_reduction <maximumf>, %19, %cst_17 [1] : vector<128x128xf32> to vector<128xf32>
    %21 = vector.shape_cast %20 : vector<128xf32> to vector<128x1xf32>
    %22 = vector.broadcast %21 : vector<128x1xf32> to vector<128x128xf32>
    %23 = arith.subf %19, %22 : vector<128x128xf32>
    %24 = math.exp %23 : vector<128x128xf32>
    %cst_18 = arith.constant dense<0.000000e+00> : vector<128xf32>
    %25 = vector.multi_reduction <add>, %24, %cst_18 [1] : vector<128x128xf32> to vector<128xf32>
    %26 = vector.shape_cast %25 : vector<128xf32> to vector<128x1xf32>
    %27 = tpu.reciprocal %26 {approx = true} : vector<128x1xf32> -> vector<128x1xf32>
    %28 = vector.broadcast %27 : vector<128x1xf32> to vector<128x128xf32>
    %29 = arith.mulf %24, %28 : vector<128x128xf32>
    %c0_19 = arith.constant 0 : index
    %c0_20 = arith.constant 0 : index
    %30 = vector.load %arg8[%c0_19, %c0_20] : memref<128x128xf32, #tpu.memory_space<vmem>>, vector<128x128xf32>
    tpu.vector_store %arg8[%c0_19, %c0_20], %29 {strides = array<i32>} : memref<128x128xf32, #tpu.memory_space<vmem>>, vector<128x128xf32>,
    return
  }
  func.func @transform_0(%arg0: i32) -> (i32, i32) {
    %c0_i32 = arith.constant 0 : i32
    %c0_i32_0 = arith.constant 0 : i32
    return %arg0, %c0_i32 : i32, i32
  }
  func.func @transform_1(%arg0: i32) -> (i32, i32) {
    %c0_i32 = arith.constant 0 : i32
    %c0_i32_0 = arith.constant 0 : i32
    %c0_i32_1 = arith.constant 0 : i32
    return %c0_i32, %c0_i32_0 : i32, i32
  }
  func.func @transform_2(%arg0: i32) -> (i32, i32) {
    %c0_i32 = arith.constant 0 : i32
    %c0_i32_0 = arith.constant 0 : i32
    %c0_i32_1 = arith.constant 0 : i32
    return %c0_i32, %c0_i32_0 : i32, i32
  }
  func.func @transform_3(%arg0: i32) -> (i32, i32) {
    %c0_i32 = arith.constant 0 : i32
    %c0_i32_0 = arith.constant 0 : i32
    %c0_i32_1 = arith.constant 0 : i32
    return %c0_i32, %c0_i32_0 : i32, i32
  }
  func.func @transform_4(%arg0: i32) -> (i32, i32) {
    %c0_i32 = arith.constant 0 : i32
    %c0_i32_0 = arith.constant 0 : i32
    %c0_i32_1 = arith.constant 0 : i32
    return %c0_i32, %c0_i32_0 : i32, i32
  }
  func.func @transform_5(%arg0: i32) -> (i32, i32) {
    %c0_i32 = arith.constant 0 : i32
    %c0_i32_0 = arith.constant 0 : i32
    %c0_i32_1 = arith.constant 0 : i32
    return %c0_i32, %c0_i32_0 : i32, i32
  }
  func.func @transform_6(%arg0: i32) -> (i32, i32) {
    %c0_i32 = arith.constant 0 : i32
    %c0_i32_0 = arith.constant 0 : i32
    %c0_i32_1 = arith.constant 0 : i32
    return %c0_i32, %c0_i32_0 : i32, i32
  }
  func.func @transform_7(%arg0: i32) -> (i32, i32) {
    %c0_i32 = arith.constant 0 : i32
    %c0_i32_0 = arith.constant 0 : i32
    return %arg0, %c0_i32 : i32, i32
  }
}

</mosaic_0001>

<llo_original>
// kernel: feedforward_flexible.1
$region0: #{feedforward_flexible.1}
  #allocation0 [shape = 'u32[]', space=smem, size = 0x4, offset = 0x4, fixed_abs, tag = 'smem constant byte address 0x4 - core index']
  #allocation1 [shape = 'u32[72,128]{1,0:T(1,128)}', space=vmem, size = 0x9000, scoped, tag = 'internal scratch']
  %s0 = inlined_call_operand.vmem [shape: f32[384,128], index: 0, kind: input, shape index: {}]
  %s1 = inlined_call_operand.vmem [shape: f32[128,128], index: 1, kind: input, shape index: {}]
  %s2 = inlined_call_operand.vmem [shape: f32[1,128], index: 2, kind: input, shape index: {}]
  %s3 = inlined_call_operand.vmem [shape: f32[128,128], index: 3, kind: input, shape index: {}]
  %s4 = inlined_call_operand.vmem [shape: f32[1,128], index: 4, kind: input, shape index: {}]
  %s5 = inlined_call_operand.vmem [shape: f32[128,128], index: 5, kind: input, shape index: {}]
  %s6 = inlined_call_operand.vmem [shape: f32[1,128], index: 6, kind: input, shape index: {}]
  %s7 = inlined_call_operand.vmem [shape: f32[384,128], index: 7, kind: output, shape index: {}]
  %s8 = sld [smem:[#allocation0]]
  $region61: #{feedforward_flexible.1} parent=0
    _
  %s10 = ssub.s32 1, %s8
  %s11 = scalar_select 0, %s10, %s8
  loop: start=0, step=1, limit=5
  $region2: #{feedforward_flexible.1} parent=0 // loop_pre_header
    _
  $region3: #{feedforward_flexible.1} parent=0 // loop_header
    %s13 = sphi 0, %s17
    %p14 = scmp.ge.s32.totalorder %s13, 5
    %s23 = sphi 0, %s25
    %s26 = sphi 0, %s23
    %s27 = sphi 0, %s26
    %s43 = sphi 0, %s27
    %s47 = sphi 0, %s47
    %s49 = sphi 0, %s47
    %s50 = sphi 0, %s49
    %s64 = sphi 0, %s50
    %s68 = sphi 0, %s68
    %s70 = sphi 0, %s68
    %s71 = sphi 0, %s70
    %s85 = sphi 0, %s71
    %s89 = sphi 0, %s89
    %s91 = sphi 0, %s89
    %s92 = sphi 0, %s91
    %s106 = sphi 0, %s92
    %s110 = sphi 0, %s110
    %s112 = sphi 0, %s110
    %s113 = sphi 0, %s112
    %s127 = sphi 0, %s113
    %s131 = sphi 0, %s131
    %s133 = sphi 0, %s131
    %s134 = sphi 0, %s133
    %s148 = sphi 0, %s134
    %s152 = sphi 0, %s152
    %s154 = sphi 0, %s152
    %s155 = sphi 0, %s154
    %s169 = sphi 0, %s155
    %s175 = sphi 0, %s177
    %s178 = sphi 0, %s175
    %s179 = sphi 0, %s178
    %s195 = sphi 0, %s179
  $region4: #{feedforward_flexible.1} parent=0 // loop_header_branch
    %16 = sbr.rel (%p14) target = $region8
  $region5: #{feedforward_flexible.1} parent=0 // loop_body
    %s18 = ssub.s32 %s13, 1
    %s19 = ssub.s32 %s13, 2
    %s20 = sadd.s32 %s13, 1
    %s21 = ssub.s32 %s13, %s20
    %p22 = scmp.eq.s32.totalorder %s21, 0
    %s24 = sadd.s32 %s23, 1
    %s25 = scalar_select %p22, %s23, %s24
    %p28 = pneg %p22
    %p29 = scmp.eq.s32.totalorder %s13, 2
    %p30 = por %p28, %p29
    %p31 = scmp.ne.s32.totalorder %s23, %s26
    %p32 = scmp.eq.s32.totalorder %s13, 0
    %p33 = por %p31, %p32
    %p34 = scmp.ne.s32.totalorder %s23, %s26
    %p35 = scmp.eq.s32.totalorder %s18, 2
    %p36 = por %p34, %p35
    %p37 = scmp.ne.s32.totalorder %s26, %s27
    %p38 = scmp.eq.s32.totalorder %s18, 0
    %p39 = por %p37, %p38
    %p40 = scmp.ne.s32.totalorder %s26, %s27
    %p41 = scmp.eq.s32.totalorder %s19, 2
    %p42 = por %p40, %p41
    %p44 = scmp.ne.s32.totalorder %s27, %s43
    %p45 = scmp.eq.s32.totalorder %s19, 0
    %p46 = por %p44, %p45
    %s48 = sadd.s32 %s47, 1
    %p51 = scmp.eq.s32.totalorder %s13, 2
    %p52 = scmp.ne.s32.totalorder %s47, %s49
    %p53 = scmp.eq.s32.totalorder %s13, 0
    %p54 = por %p52, %p53
    %p55 = scmp.ne.s32.totalorder %s47, %s49
    %p56 = scmp.eq.s32.totalorder %s18, 2
    %p57 = por %p55, %p56
    %p58 = scmp.ne.s32.totalorder %s49, %s50
    %p59 = scmp.eq.s32.totalorder %s18, 0
    %p60 = por %p58, %p59
    %p61 = scmp.ne.s32.totalorder %s49, %s50
    %p62 = scmp.eq.s32.totalorder %s19, 2
    %p63 = por %p61, %p62
    %p65 = scmp.ne.s32.totalorder %s50, %s64
    %p66 = scmp.eq.s32.totalorder %s19, 0
    %p67 = por %p65, %p66
    %s69 = sadd.s32 %s68, 1
    %p72 = scmp.eq.s32.totalorder %s13, 2
    %p73 = scmp.ne.s32.totalorder %s68, %s70
    %p74 = scmp.eq.s32.totalorder %s13, 0
    %p75 = por %p73, %p74
    %p76 = scmp.ne.s32.totalorder %s68, %s70
    %p77 = scmp.eq.s32.totalorder %s18, 2
    %p78 = por %p76, %p77
    %p79 = scmp.ne.s32.totalorder %s70, %s71
    %p80 = scmp.eq.s32.totalorder %s18, 0
    %p81 = por %p79, %p80
    %p82 = scmp.ne.s32.totalorder %s70, %s71
    %p83 = scmp.eq.s32.totalorder %s19, 2
    %p84 = por %p82, %p83
    %p86 = scmp.ne.s32.totalorder %s71, %s85
    %p87 = scmp.eq.s32.totalorder %s19, 0
    %p88 = por %p86, %p87
    %s90 = sadd.s32 %s89, 1
    %p93 = scmp.eq.s32.totalorder %s13, 2
    %p94 = scmp.ne.s32.totalorder %s89, %s91
    %p95 = scmp.eq.s32.totalorder %s13, 0
    %p96 = por %p94, %p95
    %p97 = scmp.ne.s32.totalorder %s89, %s91
    %p98 = scmp.eq.s32.totalorder %s18, 2
    %p99 = por %p97, %p98
    %p100 = scmp.ne.s32.totalorder %s91, %s92
    %p101 = scmp.eq.s32.totalorder %s18, 0
    %p102 = por %p100, %p101
    %p103 = scmp.ne.s32.totalorder %s91, %s92
    %p104 = scmp.eq.s32.totalorder %s19, 2
    %p105 = por %p103, %p104
    %p107 = scmp.ne.s32.totalorder %s92, %s106
    %p108 = scmp.eq.s32.totalorder %s19, 0
    %p109 = por %p107, %p108
    %s111 = sadd.s32 %s110, 1
    %p114 = scmp.eq.s32.totalorder %s13, 2
    %p115 = scmp.ne.s32.totalorder %s110, %s112
    %p116 = scmp.eq.s32.totalorder %s13, 0
    %p117 = por %p115, %p116
    %p118 = scmp.ne.s32.totalorder %s110, %s112
    %p119 = scmp.eq.s32.totalorder %s18, 2
    %p120 = por %p118, %p119
    %p121 = scmp.ne.s32.totalorder %s112, %s113
    %p122 = scmp.eq.s32.totalorder %s18, 0
    %p123 = por %p121, %p122
    %p124 = scmp.ne.s32.totalorder %s112, %s113
    %p125 = scmp.eq.s32.totalorder %s19, 2
    %p126 = por %p124, %p125
    %p128 = scmp.ne.s32.totalorder %s113, %s127
    %p129 = scmp.eq.s32.totalorder %s19, 0
    %p130 = por %p128, %p129
    %s132 = sadd.s32 %s131, 1
    %p135 = scmp.eq.s32.totalorder %s13, 2
    %p136 = scmp.ne.s32.totalorder %s131, %s133
    %p137 = scmp.eq.s32.totalorder %s13, 0
    %p138 = por %p136, %p137
    %p139 = scmp.ne.s32.totalorder %s131, %s133
    %p140 = scmp.eq.s32.totalorder %s18, 2
    %p141 = por %p139, %p140
    %p142 = scmp.ne.s32.totalorder %s133, %s134
    %p143 = scmp.eq.s32.totalorder %s18, 0
    %p144 = por %p142, %p143
    %p145 = scmp.ne.s32.totalorder %s133, %s134
    %p146 = scmp.eq.s32.totalorder %s19, 2
    %p147 = por %p145, %p146
    %p149 = scmp.ne.s32.totalorder %s134, %s148
    %p150 = scmp.eq.s32.totalorder %s19, 0
    %p151 = por %p149, %p150
    %s153 = sadd.s32 %s152, 1
    %p156 = scmp.eq.s32.totalorder %s13, 2
    %p157 = scmp.ne.s32.totalorder %s152, %s154
    %p158 = scmp.eq.s32.totalorder %s13, 0
    %p159 = por %p157, %p158
    %p160 = scmp.ne.s32.totalorder %s152, %s154
    %p161 = scmp.eq.s32.totalorder %s18, 2
    %p162 = por %p160, %p161
    %p163 = scmp.ne.s32.totalorder %s154, %s155
    %p164 = scmp.eq.s32.totalorder %s18, 0
    %p165 = por %p163, %p164
    %p166 = scmp.ne.s32.totalorder %s154, %s155
    %p167 = scmp.eq.s32.totalorder %s19, 2
    %p168 = por %p166, %p167
    %p170 = scmp.ne.s32.totalorder %s155, %s169
    %p171 = scmp.eq.s32.totalorder %s19, 0
    %p172 = por %p170, %p171
    %s173 = ssub.s32 %s13, %s20
    %p174 = scmp.eq.s32.totalorder %s173, 0
    %s176 = sadd.s32 %s175, 1
    %s177 = scalar_select %p174, %s175, %s176
    %p180 = pneg %p174
    %p181 = scmp.eq.s32.totalorder %s13, 2
    %p182 = por %p180, %p181
    %p183 = scmp.ne.s32.totalorder %s175, %s178
    %p184 = scmp.eq.s32.totalorder %s13, 0
    %p185 = por %p183, %p184
    %p186 = scmp.ne.s32.totalorder %s175, %s178
    %p187 = scmp.eq.s32.totalorder %s18, 2
    %p188 = por %p186, %p187
    %p189 = scmp.ne.s32.totalorder %s178, %s179
    %p190 = scmp.eq.s32.totalorder %s18, 0
    %p191 = por %p189, %p190
    %p192 = scmp.ne.s32.totalorder %s178, %s179
    %p193 = scmp.eq.s32.totalorder %s19, 2
    %p194 = por %p192, %p193
    %p196 = scmp.ne.s32.totalorder %s179, %s195
    %p197 = scmp.eq.s32.totalorder %s19, 0
    %p198 = por %p196, %p197
    %p199 = scmp.le.s32.totalorder 1, %s13
    %p200 = scmp.lt.s32.totalorder %s13, 4
    %p201 = pnand %p199, %p200
    %p202 = pneg %p201
    // Predicated region
    $region9: #{feedforward_flexible.1} parent=5 // pred_check
      _
    $region10: #{feedforward_flexible.1} parent=5 // pred_check_branch
      %204 = sbr.rel (%p201) target = $region12
    $region11: #{feedforward_flexible.1} parent=5 // pred_region
      %s205 = ssub.s32 %s13, 1
      // Predicated region
      $region13: #{feedforward_flexible.1} parent=11 // pred_check
        %p206 = pneg %p60
      $region14: #{feedforward_flexible.1} parent=11 // pred_check_branch
        %208 = sbr.rel (%p206) target = $region16
      $region15: #{feedforward_flexible.1} parent=11 // pred_region
        _
      $region16: #{feedforward_flexible.1} parent=11 // pred_fallthru
        _
      // Predicated region
      $region17: #{feedforward_flexible.1} parent=11 // pred_check
        %p209 = pneg %p81
      $region18: #{feedforward_flexible.1} parent=11 // pred_check_branch
        %211 = sbr.rel (%p209) target = $region20
      $region19: #{feedforward_flexible.1} parent=11 // pred_region
        _
      $region20: #{feedforward_flexible.1} parent=11 // pred_fallthru
        _
      // Predicated region
      $region21: #{feedforward_flexible.1} parent=11 // pred_check
        %p212 = pneg %p102
      $region22: #{feedforward_flexible.1} parent=11 // pred_check_branch
        %214 = sbr.rel (%p212) target = $region24
      $region23: #{feedforward_flexible.1} parent=11 // pred_region
        _
      $region24: #{feedforward_flexible.1} parent=11 // pred_fallthru
        _
      // Predicated region
      $region25: #{feedforward_flexible.1} parent=11 // pred_check
        %p215 = pneg %p123
      $region26: #{feedforward_flexible.1} parent=11 // pred_check_branch
        %217 = sbr.rel (%p215) target = $region28
      $region27: #{feedforward_flexible.1} parent=11 // pred_region
        _
      $region28: #{feedforward_flexible.1} parent=11 // pred_fallthru
        _
      // Predicated region
      $region29: #{feedforward_flexible.1} parent=11 // pred_check
        %p218 = pneg %p144
      $region30: #{feedforward_flexible.1} parent=11 // pred_check_branch
        %220 = sbr.rel (%p218) target = $region32
      $region31: #{feedforward_flexible.1} parent=11 // pred_region
        _
      $region32: #{feedforward_flexible.1} parent=11 // pred_fallthru
        _
      // Predicated region
      $region33: #{feedforward_flexible.1} parent=11 // pred_check
        %p221 = pneg %p165
      $region34: #{feedforward_flexible.1} parent=11 // pred_check_branch
        %223 = sbr.rel (%p221) target = $region36
      $region35: #{feedforward_flexible.1} parent=11 // pred_region
        _
      $region36: #{feedforward_flexible.1} parent=11 // pred_fallthru
        _
    $region12: #{feedforward_flexible.1} parent=5 // pred_fallthru
      _
    %p224 = scmp.lt.s32.totalorder %s13, 3
    // Predicated region
    $region37: #{feedforward_flexible.1} parent=5 // pred_check
      %p225 = pneg %p224
    $region38: #{feedforward_flexible.1} parent=5 // pred_check_branch
      %227 = sbr.rel (%p225) target = $region40
    $region39: #{feedforward_flexible.1} parent=5 // pred_region
      // Predicated region
      $region41: #{feedforward_flexible.1} parent=39 // pred_check
        %p228 = pneg %p33
      $region42: #{feedforward_flexible.1} parent=39 // pred_check_branch
        %230 = sbr.rel (%p228) target = $region44
      $region43: #{feedforward_flexible.1} parent=39 // pred_region
        %s231 = smul.u32 16, %s13
        %p232 = scmp.lt.s32.totalorder %s231, 47
        %s233 = scalar_select %p232, %s231, 47
        %s234 = smul.addr %s233, 8
        %s235 = scalar_lea.vmem %s0, %s234
        %s236 = smul.u32 16, %s13
      $region44: #{feedforward_flexible.1} parent=39 // pred_fallthru
        _
    $region40: #{feedforward_flexible.1} parent=5 // pred_fallthru
      _
    %p237 = scmp.le.s32.totalorder 1, %s13
    %p238 = scmp.lt.s32.totalorder %s13, 4
    %p239 = pnand %p237, %p238
    %p240 = pneg %p239
    // Predicated region
    $region45: #{feedforward_flexible.1} parent=5 // pred_check
      _
    $region46: #{feedforward_flexible.1} parent=5 // pred_check_branch
      %242 = sbr.rel (%p239) target = $region48
    $region47: #{feedforward_flexible.1} parent=5 // pred_region
      %s243 = ssub.s32 %s13, 1
      %s244 = smul.u32 16, %s18
      %p245 = scmp.lt.s32.totalorder %s244, 47
      %s246 = scalar_select %p245, %s244, 47
      %s247 = smul.addr %s246, 8
      %s248 = scalar_lea.vmem %s0, %s247
      %p249 = pneg %p39
      %p250 = pneg %p36
      %p251 = pneg %p60
      %p252 = pneg %p57
      %p253 = pneg %p81
      %p254 = pneg %p78
      %p255 = pneg %p102
      %p256 = pneg %p99
      %p257 = pneg %p123
      %p258 = pneg %p120
      %p259 = pneg %p144
      %p260 = pneg %p141
      %p261 = pneg %p165
      %p262 = pneg %p162
      %p263 = pneg %p191
      %p264 = pneg %p188
      %s265 = smul.u32 16, %s18
      %p266 = scmp.lt.s32.totalorder %s265, 47
      %s267 = scalar_select %p266, %s265, 47
      %s268 = smul.addr %s267, 8
      %s269 = scalar_lea.vmem %s7, %s268
      %s270 = smul.u32 16, %s18
      %p271 = scmp.lt.s32.totalorder %s270, 47
      %s272 = scalar_select %p271, %s270, 47
      %s273 = smul.addr %s272, 8
      %s274 = scalar_lea.vmem %s0, %s273
      %s275 = smul.u32 16, %s18
      %s276 = smul.u32 16, %s18
      %p277 = scmp.lt.s32.totalorder %s276, 47
      %s278 = scalar_select %p277, %s276, 47
      %s279 = smul.addr %s278, 8
      %s280 = scalar_lea.vmem %s7, %s279
      %s281 = smul.u32 16, %s18
      %v282 = vld [vmem:[%s274] sm:$0xff]
      %v283 = vld [vmem:[%s274 + $0x8] sm:$0xff]
      %v284 = vld [vmem:[%s274 + $0x10] sm:$0xff]
      %v285 = vld [vmem:[%s274 + $0x18] sm:$0xff]
      %v286 = vld [vmem:[%s274 + $0x20] sm:$0xff]
      %v287 = vld [vmem:[%s274 + $0x28] sm:$0xff]
      %v288 = vld [vmem:[%s274 + $0x30] sm:$0xff]
      %v289 = vld [vmem:[%s274 + $0x38] sm:$0xff]
      %v290 = vld [vmem:[%s274 + $0x40] sm:$0xff]
      %v291 = vld [vmem:[%s274 + $0x48] sm:$0xff]
      %v292 = vld [vmem:[%s274 + $0x50] sm:$0xff]
      %v293 = vld [vmem:[%s274 + $0x58] sm:$0xff]
      %v294 = vld [vmem:[%s274 + $0x60] sm:$0xff]
      %v295 = vld [vmem:[%s274 + $0x68] sm:$0xff]
      %v296 = vld [vmem:[%s274 + $0x70] sm:$0xff]
      %v297 = vld [vmem:[%s274 + $0x78] sm:$0xff]
      %v298 = vld [vmem:[%s1] sm:$0xff]
      %v299 = vld [vmem:[%s1 + $0x8] sm:$0xff]
      %v300 = vld [vmem:[%s1 + $0x10] sm:$0xff]
      %v301 = vld [vmem:[%s1 + $0x18] sm:$0xff]
      %v302 = vld [vmem:[%s1 + $0x20] sm:$0xff]
      %v303 = vld [vmem:[%s1 + $0x28] sm:$0xff]
      %v304 = vld [vmem:[%s1 + $0x30] sm:$0xff]
      %v305 = vld [vmem:[%s1 + $0x38] sm:$0xff]
      %v306 = vld [vmem:[%s1 + $0x40] sm:$0xff]
      %v307 = vld [vmem:[%s1 + $0x48] sm:$0xff]
      %v308 = vld [vmem:[%s1 + $0x50] sm:$0xff]
      %v309 = vld [vmem:[%s1 + $0x58] sm:$0xff]
      %v310 = vld [vmem:[%s1 + $0x60] sm:$0xff]
      %v311 = vld [vmem:[%s1 + $0x68] sm:$0xff]
      %v312 = vld [vmem:[%s1 + $0x70] sm:$0xff]
      %v313 = vld [vmem:[%s1 + $0x78] sm:$0xff]
      %v314 = vld [vmem:[%s2] sm:$0x1]
      %v316 = vperm.slane %v314, 0
      %318 = vmatpush.msra.mxu0 %v313
      %319 = vmatpush.msra.mxu0 %v312
      %320 = vmatpush.msra.mxu0 %v311
      %321 = vmatpush.msra.mxu0 %v310
      %322 = vmatpush.msra.mxu0 %v309
      %323 = vmatpush.msra.mxu0 %v308
      %324 = vmatpush.msra.mxu0 %v307
      %325 = vmatpush.msra.mxu0 %v306
      %326 = vmatpush.msra.mxu0 %v305
      %327 = vmatpush.msra.mxu0 %v304
      %328 = vmatpush.msra.mxu0 %v303
      %329 = vmatpush.msra.mxu0 %v302
      %330 = vmatpush.msra.mxu0 %v301
      %331 = vmatpush.msra.mxu0 %v300
      %332 = vmatpush.msra.mxu0 %v299
      %333 = vmatpush.msra.mxu0 %v298
      %334 = vmatmul.f32.gmra.mxu0 %v282
      %v335 = vpop.f32.mrf.mxu0
      %v336 = vadd.f32 %v316, %v335
      %337 = vmatmul.f32.gmra.mxu0 %v283
      %v338 = vpop.f32.mrf.mxu0
      %v339 = vadd.f32 %v316, %v338
      %340 = vmatmul.f32.gmra.mxu0 %v284
      %v341 = vpop.f32.mrf.mxu0
      %v342 = vadd.f32 %v316, %v341
      %343 = vmatmul.f32.gmra.mxu0 %v285
      %v344 = vpop.f32.mrf.mxu0
      %v345 = vadd.f32 %v316, %v344
      %346 = vmatmul.f32.gmra.mxu0 %v286
      %v347 = vpop.f32.mrf.mxu0
      %v348 = vadd.f32 %v316, %v347
      %349 = vmatmul.f32.gmra.mxu0 %v287
      %v350 = vpop.f32.mrf.mxu0
      %v351 = vadd.f32 %v316, %v350
      %352 = vmatmul.f32.gmra.mxu0 %v288
      %v353 = vpop.f32.mrf.mxu0
      %v354 = vadd.f32 %v316, %v353
      %355 = vmatmul.f32.gmra.mxu0 %v289
      %v356 = vpop.f32.mrf.mxu0
      %v357 = vadd.f32 %v316, %v356
      %358 = vmatmul.f32.gmra.mxu0 %v290
      %v359 = vpop.f32.mrf.mxu0
      %v360 = vadd.f32 %v316, %v359
      %361 = vmatmul.f32.gmra.mxu0 %v291
      %v362 = vpop.f32.mrf.mxu0
      %v363 = vadd.f32 %v316, %v362
      %364 = vmatmul.f32.gmra.mxu0 %v292
      %v365 = vpop.f32.mrf.mxu0
      %v366 = vadd.f32 %v316, %v365
      %367 = vmatmul.f32.gmra.mxu0 %v293
      %v368 = vpop.f32.mrf.mxu0
      %v369 = vadd.f32 %v316, %v368
      %370 = vmatmul.f32.gmra.mxu0 %v294
      %v371 = vpop.f32.mrf.mxu0
      %v372 = vadd.f32 %v316, %v371
      %373 = vmatmul.f32.gmra.mxu0 %v295
      %v374 = vpop.f32.mrf.mxu0
      %v375 = vadd.f32 %v316, %v374
      %376 = vmatmul.f32.gmra.mxu0 %v296
      %v377 = vpop.f32.mrf.mxu0
      %v378 = vadd.f32 %v316, %v377
      %379 = vmatmul.f32.gmra.mxu0 %v297
      %v380 = vpop.f32.mrf.mxu0
      %v381 = vadd.f32 %v316, %v380
      %382 = vdwg.mxu0
      %v383 = vmax.f32 %v336, 0.0
      %v384 = vmax.f32 %v339, 0.0
      %v385 = vmax.f32 %v342, 0.0
      %v386 = vmax.f32 %v345, 0.0
      %v387 = vmax.f32 %v348, 0.0
      %v388 = vmax.f32 %v351, 0.0
      %v389 = vmax.f32 %v354, 0.0
      %v390 = vmax.f32 %v357, 0.0
      %v391 = vmax.f32 %v360, 0.0
      %v392 = vmax.f32 %v363, 0.0
      %v393 = vmax.f32 %v366, 0.0
      %v394 = vmax.f32 %v369, 0.0
      %v395 = vmax.f32 %v372, 0.0
      %v396 = vmax.f32 %v375, 0.0
      %v397 = vmax.f32 %v378, 0.0
      %v398 = vmax.f32 %v381, 0.0
      %v399 = vld [vmem:[%s3] sm:$0xff]
      %v400 = vld [vmem:[%s3 + $0x8] sm:$0xff]
      %v401 = vld [vmem:[%s3 + $0x10] sm:$0xff]
      %v402 = vld [vmem:[%s3 + $0x18] sm:$0xff]
      %v403 = vld [vmem:[%s3 + $0x20] sm:$0xff]
      %v404 = vld [vmem:[%s3 + $0x28] sm:$0xff]
      %v405 = vld [vmem:[%s3 + $0x30] sm:$0xff]
      %v406 = vld [vmem:[%s3 + $0x38] sm:$0xff]
      %v407 = vld [vmem:[%s3 + $0x40] sm:$0xff]
      %v408 = vld [vmem:[%s3 + $0x48] sm:$0xff]
      %v409 = vld [vmem:[%s3 + $0x50] sm:$0xff]
      %v410 = vld [vmem:[%s3 + $0x58] sm:$0xff]
      %v411 = vld [vmem:[%s3 + $0x60] sm:$0xff]
      %v412 = vld [vmem:[%s3 + $0x68] sm:$0xff]
      %v413 = vld [vmem:[%s3 + $0x70] sm:$0xff]
      %v414 = vld [vmem:[%s3 + $0x78] sm:$0xff]
      %v415 = vld [vmem:[%s4] sm:$0x1]
      %v417 = vperm.slane %v415, 0
      %419 = vmatpush.msra.mxu0 %v414
      %420 = vmatpush.msra.mxu0 %v413
      %421 = vmatpush.msra.mxu0 %v412
      %422 = vmatpush.msra.mxu0 %v411
      %423 = vmatpush.msra.mxu0 %v410
      %424 = vmatpush.msra.mxu0 %v409
      %425 = vmatpush.msra.mxu0 %v408
      %426 = vmatpush.msra.mxu0 %v407
      %427 = vmatpush.msra.mxu0 %v406
      %428 = vmatpush.msra.mxu0 %v405
      %429 = vmatpush.msra.mxu0 %v404
      %430 = vmatpush.msra.mxu0 %v403
      %431 = vmatpush.msra.mxu0 %v402
      %432 = vmatpush.msra.mxu0 %v401
      %433 = vmatpush.msra.mxu0 %v400
      %434 = vmatpush.msra.mxu0 %v399
      %435 = vmatmul.f32.gmra.mxu0 %v383
      %v436 = vpop.f32.mrf.mxu0
      %v437 = vadd.f32 %v417, %v436
      %438 = vmatmul.f32.gmra.mxu0 %v384
      %v439 = vpop.f32.mrf.mxu0
      %v440 = vadd.f32 %v417, %v439
      %441 = vmatmul.f32.gmra.mxu0 %v385
      %v442 = vpop.f32.mrf.mxu0
      %v443 = vadd.f32 %v417, %v442
      %444 = vmatmul.f32.gmra.mxu0 %v386
      %v445 = vpop.f32.mrf.mxu0
      %v446 = vadd.f32 %v417, %v445
      %447 = vmatmul.f32.gmra.mxu0 %v387
      %v448 = vpop.f32.mrf.mxu0
      %v449 = vadd.f32 %v417, %v448
      %450 = vmatmul.f32.gmra.mxu0 %v388
      %v451 = vpop.f32.mrf.mxu0
      %v452 = vadd.f32 %v417, %v451
      %453 = vmatmul.f32.gmra.mxu0 %v389
      %v454 = vpop.f32.mrf.mxu0
      %v455 = vadd.f32 %v417, %v454
      %456 = vmatmul.f32.gmra.mxu0 %v390
      %v457 = vpop.f32.mrf.mxu0
      %v458 = vadd.f32 %v417, %v457
      %459 = vmatmul.f32.gmra.mxu0 %v391
      %v460 = vpop.f32.mrf.mxu0
      %v461 = vadd.f32 %v417, %v460
      %462 = vmatmul.f32.gmra.mxu0 %v392
      %v463 = vpop.f32.mrf.mxu0
      %v464 = vadd.f32 %v417, %v463
      %465 = vmatmul.f32.gmra.mxu0 %v393
      %v466 = vpop.f32.mrf.mxu0
      %v467 = vadd.f32 %v417, %v466
      %468 = vmatmul.f32.gmra.mxu0 %v394
      %v469 = vpop.f32.mrf.mxu0
      %v470 = vadd.f32 %v417, %v469
      %471 = vmatmul.f32.gmra.mxu0 %v395
      %v472 = vpop.f32.mrf.mxu0
      %v473 = vadd.f32 %v417, %v472
      %474 = vmatmul.f32.gmra.mxu0 %v396
      %v475 = vpop.f32.mrf.mxu0
      %v476 = vadd.f32 %v417, %v475
      %477 = vmatmul.f32.gmra.mxu0 %v397
      %v478 = vpop.f32.mrf.mxu0
      %v479 = vadd.f32 %v417, %v478
      %480 = vmatmul.f32.gmra.mxu0 %v398
      %v481 = vpop.f32.mrf.mxu0
      %v482 = vadd.f32 %v417, %v481
      %483 = vdwg.mxu0
      %v484 = vmax.f32 %v437, 0.0
      %v485 = vmax.f32 %v440, 0.0
      %v486 = vmax.f32 %v443, 0.0
      %v487 = vmax.f32 %v446, 0.0
      %v488 = vmax.f32 %v449, 0.0
      %v489 = vmax.f32 %v452, 0.0
      %v490 = vmax.f32 %v455, 0.0
      %v491 = vmax.f32 %v458, 0.0
      %v492 = vmax.f32 %v461, 0.0
      %v493 = vmax.f32 %v464, 0.0
      %v494 = vmax.f32 %v467, 0.0
      %v495 = vmax.f32 %v470, 0.0
      %v496 = vmax.f32 %v473, 0.0
      %v497 = vmax.f32 %v476, 0.0
      %v498 = vmax.f32 %v479, 0.0
      %v499 = vmax.f32 %v482, 0.0
      %v500 = vld [vmem:[%s5] sm:$0xff]
      %v501 = vld [vmem:[%s5 + $0x8] sm:$0xff]
      %v502 = vld [vmem:[%s5 + $0x10] sm:$0xff]
      %v503 = vld [vmem:[%s5 + $0x18] sm:$0xff]
      %v504 = vld [vmem:[%s5 + $0x20] sm:$0xff]
      %v505 = vld [vmem:[%s5 + $0x28] sm:$0xff]
      %v506 = vld [vmem:[%s5 + $0x30] sm:$0xff]
      %v507 = vld [vmem:[%s5 + $0x38] sm:$0xff]
      %v508 = vld [vmem:[%s5 + $0x40] sm:$0xff]
      %v509 = vld [vmem:[%s5 + $0x48] sm:$0xff]
      %v510 = vld [vmem:[%s5 + $0x50] sm:$0xff]
      %v511 = vld [vmem:[%s5 + $0x58] sm:$0xff]
      %v512 = vld [vmem:[%s5 + $0x60] sm:$0xff]
      %v513 = vld [vmem:[%s5 + $0x68] sm:$0xff]
      %v514 = vld [vmem:[%s5 + $0x70] sm:$0xff]
      %v515 = vld [vmem:[%s5 + $0x78] sm:$0xff]
      %v516 = vld [vmem:[%s6] sm:$0x1]
      %v518 = vperm.slane %v516, 0
      %520 = vmatpush.msra.mxu0 %v515
      %521 = vmatpush.msra.mxu0 %v514
      %522 = vmatpush.msra.mxu0 %v513
      %523 = vmatpush.msra.mxu0 %v512
      %524 = vmatpush.msra.mxu0 %v511
      %525 = vmatpush.msra.mxu0 %v510
      %526 = vmatpush.msra.mxu0 %v509
      %527 = vmatpush.msra.mxu0 %v508
      %528 = vmatpush.msra.mxu0 %v507
      %529 = vmatpush.msra.mxu0 %v506
      %530 = vmatpush.msra.mxu0 %v505
      %531 = vmatpush.msra.mxu0 %v504
      %532 = vmatpush.msra.mxu0 %v503
      %533 = vmatpush.msra.mxu0 %v502
      %534 = vmatpush.msra.mxu0 %v501
      %535 = vmatpush.msra.mxu0 %v500
      %536 = vmatmul.f32.gmra.mxu0 %v484
      %v537 = vpop.f32.mrf.mxu0
      %v538 = vadd.f32 %v518, %v537
      %539 = vmatmul.f32.gmra.mxu0 %v485
      %v540 = vpop.f32.mrf.mxu0
      %v541 = vadd.f32 %v518, %v540
      %542 = vmatmul.f32.gmra.mxu0 %v486
      %v543 = vpop.f32.mrf.mxu0
      %v544 = vadd.f32 %v518, %v543
      %545 = vmatmul.f32.gmra.mxu0 %v487
      %v546 = vpop.f32.mrf.mxu0
      %v547 = vadd.f32 %v518, %v546
      %548 = vmatmul.f32.gmra.mxu0 %v488
      %v549 = vpop.f32.mrf.mxu0
      %v550 = vadd.f32 %v518, %v549
      %551 = vmatmul.f32.gmra.mxu0 %v489
      %v552 = vpop.f32.mrf.mxu0
      %v553 = vadd.f32 %v518, %v552
      %554 = vmatmul.f32.gmra.mxu0 %v490
      %v555 = vpop.f32.mrf.mxu0
      %v556 = vadd.f32 %v518, %v555
      %557 = vmatmul.f32.gmra.mxu0 %v491
      %v558 = vpop.f32.mrf.mxu0
      %v559 = vadd.f32 %v518, %v558
      %560 = vmatmul.f32.gmra.mxu0 %v492
      %v561 = vpop.f32.mrf.mxu0
      %v562 = vadd.f32 %v518, %v561
      %563 = vmatmul.f32.gmra.mxu0 %v493
      %v564 = vpop.f32.mrf.mxu0
      %v565 = vadd.f32 %v518, %v564
      %566 = vmatmul.f32.gmra.mxu0 %v494
      %v567 = vpop.f32.mrf.mxu0
      %v568 = vadd.f32 %v518, %v567
      %569 = vmatmul.f32.gmra.mxu0 %v495
      %v570 = vpop.f32.mrf.mxu0
      %v571 = vadd.f32 %v518, %v570
      %572 = vmatmul.f32.gmra.mxu0 %v496
      %v573 = vpop.f32.mrf.mxu0
      %v574 = vadd.f32 %v518, %v573
      %575 = vmatmul.f32.gmra.mxu0 %v497
      %v576 = vpop.f32.mrf.mxu0
      %v577 = vadd.f32 %v518, %v576
      %578 = vmatmul.f32.gmra.mxu0 %v498
      %v579 = vpop.f32.mrf.mxu0
      %v580 = vadd.f32 %v518, %v579
      %581 = vmatmul.f32.gmra.mxu0 %v499
      %v582 = vpop.f32.mrf.mxu0
      %v583 = vadd.f32 %v518, %v582
      %584 = vdwg.mxu0
      %585 = vmax.xlane.f32.xlu0 %v538
      %v586 = vpop.xlane.xlu0 %585
      %587 = vmax.xlane.f32.xlu0 %v541
      %v588 = vpop.xlane.xlu0 %587
      %589 = vmax.xlane.f32.xlu0 %v544
      %v590 = vpop.xlane.xlu0 %589
      %591 = vmax.xlane.f32.xlu0 %v547
      %v592 = vpop.xlane.xlu0 %591
      %593 = vmax.xlane.f32.xlu0 %v550
      %v594 = vpop.xlane.xlu0 %593
      %595 = vmax.xlane.f32.xlu0 %v553
      %v596 = vpop.xlane.xlu0 %595
      %597 = vmax.xlane.f32.xlu0 %v556
      %v598 = vpop.xlane.xlu0 %597
      %599 = vmax.xlane.f32.xlu0 %v559
      %v600 = vpop.xlane.xlu0 %599
      %601 = vmax.xlane.f32.xlu0 %v562
      %v602 = vpop.xlane.xlu0 %601
      %603 = vmax.xlane.f32.xlu0 %v565
      %v604 = vpop.xlane.xlu0 %603
      %605 = vmax.xlane.f32.xlu0 %v568
      %v606 = vpop.xlane.xlu0 %605
      %607 = vmax.xlane.f32.xlu0 %v571
      %v608 = vpop.xlane.xlu0 %607
      %609 = vmax.xlane.f32.xlu0 %v574
      %v610 = vpop.xlane.xlu0 %609
      %611 = vmax.xlane.f32.xlu0 %v577
      %v612 = vpop.xlane.xlu0 %611
      %613 = vmax.xlane.f32.xlu0 %v580
      %v614 = vpop.xlane.xlu0 %613
      %615 = vmax.xlane.f32.xlu0 %v583
      %v616 = vpop.xlane.xlu0 %615
      %v617 = vsub.f32 %v538, %v586
      %v618 = vsub.f32 %v541, %v588
      %v619 = vsub.f32 %v544, %v590
      %v620 = vsub.f32 %v547, %v592
      %v621 = vsub.f32 %v550, %v594
      %v622 = vsub.f32 %v553, %v596
      %v623 = vsub.f32 %v556, %v598
      %v624 = vsub.f32 %v559, %v600
      %v625 = vsub.f32 %v562, %v602
      %v626 = vsub.f32 %v565, %v604
      %v627 = vsub.f32 %v568, %v606
      %v628 = vsub.f32 %v571, %v608
      %v629 = vsub.f32 %v574, %v610
      %v630 = vsub.f32 %v577, %v612
      %v631 = vsub.f32 %v580, %v614
      %v632 = vsub.f32 %v583, %v616
      %v633 = vmul.f32 %v617, 1.442695
      %v634 = vpow.pop %v633
      %v635 = vmul.f32 %v618, 1.442695
      %v636 = vpow.pop %v635
      %v637 = vmul.f32 %v619, 1.442695
      %v638 = vpow.pop %v637
      %v639 = vmul.f32 %v620, 1.442695
      %v640 = vpow.pop %v639
      %v641 = vmul.f32 %v621, 1.442695
      %v642 = vpow.pop %v641
      %v643 = vmul.f32 %v622, 1.442695
      %v644 = vpow.pop %v643
      %v645 = vmul.f32 %v623, 1.442695
      %v646 = vpow.pop %v645
      %v647 = vmul.f32 %v624, 1.442695
      %v648 = vpow.pop %v647
      %v649 = vmul.f32 %v625, 1.442695
      %v650 = vpow.pop %v649
      %v651 = vmul.f32 %v626, 1.442695
      %v652 = vpow.pop %v651
      %v653 = vmul.f32 %v627, 1.442695
      %v654 = vpow.pop %v653
      %v655 = vmul.f32 %v628, 1.442695
      %v656 = vpow.pop %v655
      %v657 = vmul.f32 %v629, 1.442695
      %v658 = vpow.pop %v657
      %v659 = vmul.f32 %v630, 1.442695
      %v660 = vpow.pop %v659
      %v661 = vmul.f32 %v631, 1.442695
      %v662 = vpow.pop %v661
      %v663 = vmul.f32 %v632, 1.442695
      %v664 = vpow.pop %v663
      %665 = vadd.xlane.f32.xlu0 %v634
      %v666 = vpop.xlane.xlu0 %665
      %667 = vadd.xlane.f32.xlu0 %v636
      %v668 = vpop.xlane.xlu0 %667
      %669 = vadd.xlane.f32.xlu0 %v638
      %v670 = vpop.xlane.xlu0 %669
      %671 = vadd.xlane.f32.xlu0 %v640
      %v672 = vpop.xlane.xlu0 %671
      %673 = vadd.xlane.f32.xlu0 %v642
      %v674 = vpop.xlane.xlu0 %673
      %675 = vadd.xlane.f32.xlu0 %v644
      %v676 = vpop.xlane.xlu0 %675
      %677 = vadd.xlane.f32.xlu0 %v646
      %v678 = vpop.xlane.xlu0 %677
      %679 = vadd.xlane.f32.xlu0 %v648
      %v680 = vpop.xlane.xlu0 %679
      %681 = vadd.xlane.f32.xlu0 %v650
      %v682 = vpop.xlane.xlu0 %681
      %683 = vadd.xlane.f32.xlu0 %v652
      %v684 = vpop.xlane.xlu0 %683
      %685 = vadd.xlane.f32.xlu0 %v654
      %v686 = vpop.xlane.xlu0 %685
      %687 = vadd.xlane.f32.xlu0 %v656
      %v688 = vpop.xlane.xlu0 %687
      %689 = vadd.xlane.f32.xlu0 %v658
      %v690 = vpop.xlane.xlu0 %689
      %691 = vadd.xlane.f32.xlu0 %v660
      %v692 = vpop.xlane.xlu0 %691
      %693 = vadd.xlane.f32.xlu0 %v662
      %v694 = vpop.xlane.xlu0 %693
      %695 = vadd.xlane.f32.xlu0 %v664
      %v696 = vpop.xlane.xlu0 %695
      %v697 = vrcp.pop %v666
      %v698 = vrcp.pop %v668
      %v699 = vrcp.pop %v670
      %v700 = vrcp.pop %v672
      %v701 = vrcp.pop %v674
      %v702 = vrcp.pop %v676
      %v703 = vrcp.pop %v678
      %v704 = vrcp.pop %v680
      %v705 = vrcp.pop %v682
      %v706 = vrcp.pop %v684
      %v707 = vrcp.pop %v686
      %v708 = vrcp.pop %v688
      %v709 = vrcp.pop %v690
      %v710 = vrcp.pop %v692
      %v711 = vrcp.pop %v694
      %v712 = vrcp.pop %v696
      %v713 = vmul.f32 %v634, %v697
      %v714 = vmul.f32 %v636, %v698
      %v715 = vmul.f32 %v638, %v699
      %v716 = vmul.f32 %v640, %v700
      %v717 = vmul.f32 %v642, %v701
      %v718 = vmul.f32 %v644, %v702
      %v719 = vmul.f32 %v646, %v703
      %v720 = vmul.f32 %v648, %v704
      %v721 = vmul.f32 %v650, %v705
      %v722 = vmul.f32 %v652, %v706
      %v723 = vmul.f32 %v654, %v707
      %v724 = vmul.f32 %v656, %v708
      %v725 = vmul.f32 %v658, %v709
      %v726 = vmul.f32 %v660, %v710
      %v727 = vmul.f32 %v662, %v711
      %v728 = vmul.f32 %v664, %v712
      %729 = vst [vmem:[%s280] sm:$0xff] %v713
      %730 = vst [vmem:[%s280 + $0x8] sm:$0xff] %v714
      %731 = vst [vmem:[%s280 + $0x10] sm:$0xff] %v715
      %732 = vst [vmem:[%s280 + $0x18] sm:$0xff] %v716
      %733 = vst [vmem:[%s280 + $0x20] sm:$0xff] %v717
      %734 = vst [vmem:[%s280 + $0x28] sm:$0xff] %v718
      %735 = vst [vmem:[%s280 + $0x30] sm:$0xff] %v719
      %736 = vst [vmem:[%s280 + $0x38] sm:$0xff] %v720
      %737 = vst [vmem:[%s280 + $0x40] sm:$0xff] %v721
      %738 = vst [vmem:[%s280 + $0x48] sm:$0xff] %v722
      %739 = vst [vmem:[%s280 + $0x50] sm:$0xff] %v723
      %740 = vst [vmem:[%s280 + $0x58] sm:$0xff] %v724
      %741 = vst [vmem:[%s280 + $0x60] sm:$0xff] %v725
      %742 = vst [vmem:[%s280 + $0x68] sm:$0xff] %v726
      %743 = vst [vmem:[%s280 + $0x70] sm:$0xff] %v727
      %744 = vst [vmem:[%s280 + $0x78] sm:$0xff] %v728
      %s745 = smul.u32 16, %s18
      %p746 = scmp.lt.s32.totalorder %s745, 47
      %s747 = scalar_select %p746, %s745, 47
      %s748 = smul.addr %s747, 8
      %s749 = scalar_lea.vmem %s7, %s748
      // Predicated region
      $region49: #{feedforward_flexible.1} parent=47 // pred_check
        %p750 = pneg %p188
      $region50: #{feedforward_flexible.1} parent=47 // pred_check_branch
        %752 = sbr.rel (%p750) target = $region52
      $region51: #{feedforward_flexible.1} parent=47 // pred_region
        %s753 = smul.u32 16, %s18
      $region52: #{feedforward_flexible.1} parent=47 // pred_fallthru
        _
    $region48: #{feedforward_flexible.1} parent=5 // pred_fallthru
      _
    %p754 = scmp.le.s32.totalorder 2, %s13
    // Predicated region
    $region53: #{feedforward_flexible.1} parent=5 // pred_check
      %p755 = pneg %p754
    $region54: #{feedforward_flexible.1} parent=5 // pred_check_branch
      %757 = sbr.rel (%p755) target = $region56
    $region55: #{feedforward_flexible.1} parent=5 // pred_region
      %s758 = ssub.s32 %s13, 2
      // Predicated region
      $region57: #{feedforward_flexible.1} parent=55 // pred_check
        %p759 = pneg %p194
      $region58: #{feedforward_flexible.1} parent=55 // pred_check_branch
        %761 = sbr.rel (%p759) target = $region60
      $region59: #{feedforward_flexible.1} parent=55 // pred_region
        %s762 = smul.u32 16, %s19
        %p763 = scmp.lt.s32.totalorder %s762, 47
        %s764 = scalar_select %p763, %s762, 47
        %s765 = smul.addr %s764, 8
        %s766 = scalar_lea.vmem %s7, %s765
      $region60: #{feedforward_flexible.1} parent=55 // pred_fallthru
        _
    $region56: #{feedforward_flexible.1} parent=5 // pred_fallthru
      _
  $region6: #{feedforward_flexible.1} parent=0 // loop_footer
    %s17 = sadd.s32 1, %s13
  $region7: #{feedforward_flexible.1} parent=0 // loop_footer_branch
    %12 = sbr.rel target = $region3
  $region8: #{feedforward_flexible.1} parent=0 // loop_exit
    _

</llo_original>
